<compile_context>
chip_gen: v7x
topology: tpu7x:2x2x1
jax: 0.10.0
libtpu: 0.0.40
codegen_flags: <defaults>
</compile_context>

<pallas_src>
import jax
import jax.numpy as jnp
from jax.experimental import pallas as pl
from jax.experimental.pallas import tpu as pltpu


# -----------------------------------------------------------------------------
# Kernel
# -----------------------------------------------------------------------------
def _add_pe_kernel(x_ref, pe_ref, o_ref):
    # x_ref / o_ref: (TB, TC) lane-dense tile of the flattened (B, L*D) slab.
    # pe_ref:        (1, TC) positional-encoding tile, broadcast over batch
    #                sublanes (cheap VPU broadcast, hidden under the DMAs).
    o_ref[...] = x_ref[...] + pe_ref[...]


# -----------------------------------------------------------------------------
# PE table (deterministic, non-trainable buffer — identical to torch __init__)
# -----------------------------------------------------------------------------
def make_positional_encoding(d_model: int, max_len: int = 975) -> jnp.ndarray:
    position = jnp.arange(0, max_len, dtype=jnp.float32)[:, None]            # (max_len, 1)
    div_term = jnp.exp(
        jnp.arange(0, d_model, 2, dtype=jnp.float32)
        * -(jnp.log(jnp.float32(10000.0)) / d_model)
    )                                                                        # (d_model/2,)
    angles = position * div_term                                             # (max_len, d_model/2)
    pe = jnp.zeros((max_len, d_model), dtype=jnp.float32)
    pe = pe.at[:, 0::2].set(jnp.sin(angles))
    pe = pe.at[:, 1::2].set(jnp.cos(angles))
    return pe                                                                # (max_len, d_model)


# -----------------------------------------------------------------------------
# Tiling heuristics (static, trace-time Python on shapes)
# -----------------------------------------------------------------------------
_BLOCK_BYTES = 4 * 1024 * 1024  # target x-block bytes; 2x (in+out) x 2 buffers ~ 16 MiB VMEM


def _pick_col_tile(n_cols: int, max_cols: int) -> int:
    """Largest multiple of 128 dividing n_cols and <= max_cols (lane-dense tiles)."""
    if n_cols % 128 != 0:
        return n_cols  # fall back: block == full last dim (always legal)
    best = 128
    c = 256
    limit = min(n_cols, max(128, max_cols))
    while c <= limit:
        if n_cols % c == 0:
            best = c
        c += 128
    # Prefer >=2 column tiles so both v7x TensorCores get work.
    if best == n_cols and (n_cols // 2) % 128 == 0:
        best = n_cols // 2
    return best


def _pick_batch_tile(batch: int, col_tile: int, itemsize: int) -> int:
    tb = batch
    budget_elems = _BLOCK_BYTES // itemsize
    # Only split batch when it divides cleanly into multiples of 8
    # (keeps the (8,128) block-shape constraint satisfied).
    while tb * col_tile > budget_elems and tb % 2 == 0 and (tb // 2) % 8 == 0:
        tb //= 2
    return tb


# -----------------------------------------------------------------------------
# Forward wrapper
# -----------------------------------------------------------------------------
def positional_encoding_forward(x: jnp.ndarray, pe_full: jnp.ndarray) -> jnp.ndarray:
    """x: (B, L, D); pe_full: (max_len, D). Returns x + pe[:L] (eval-mode dropout)."""
    B, L, D = x.shape
    assert L <= pe_full.shape[0], "sequence longer than max_len"
    LD = L * D
    itemsize = jnp.dtype(x.dtype).itemsize

    # Lane-dense 2-D views (layout plumbing, no data movement / extra compute).
    x2 = x.reshape(B, LD)                                   # (B, L*D)
    pe2 = pe_full[:L, :].astype(x.dtype).reshape(1, LD)     # (1, L*D), dtype-matched

    budget_elems = max(128, _BLOCK_BYTES // itemsize)
    tc = _pick_col_tile(LD, budget_elems // max(B, 1))
    tb = _pick_batch_tile(B, tc, itemsize)
    # Extra guard: if the batch can't be split, shrink columns to fit the budget.
    while tb * tc * itemsize > _BLOCK_BYTES and tc % 256 == 0 and LD % (tc // 2) == 0:
        tc //= 2
    nb = B // tb
    nc = LD // tc

    out2 = pl.pallas_call(
        _add_pe_kernel,
        out_shape=jax.ShapeDtypeStruct((B, LD), x.dtype),
        grid=(nb, nc),
        in_specs=[
            pl.BlockSpec((tb, tc), lambda i, j: (i, j)),    # x tile
            pl.BlockSpec((1, tc), lambda i, j: (0, j)),     # pe tile (shared over batch)
        ],
        out_specs=pl.BlockSpec((tb, tc), lambda i, j: (i, j)),
        compiler_params=pltpu.CompilerParams(
            dimension_semantics=("parallel", "parallel"),
            vmem_limit_bytes=32 * 1024 * 1024,
        ),
    )(x2, pe2)

    return out2.reshape(B, L, D)


# -----------------------------------------------------------------------------
# Self-test
# -----------------------------------------------------------------------------
if __name__ == "__main__":
    B, L, D = 2, 8, 32
    MAX_LEN = 975

    key = jax.random.PRNGKey(0)
    x = jax.random.normal(key, (B, L, D), dtype=jnp.float32)
    pe_full = make_positional_encoding(D, MAX_LEN)

    # Reference (eval-mode: dropout is identity).
    ref = x + pe_full[None, :L, :].astype(x.dtype)

    fwd = jax.jit(positional_encoding_forward)
    out = jax.block_until_ready(fwd(x, pe_full))

    assert out.shape == (B, L, D)
    assert jnp.allclose(out, ref, atol=1e-6), "mismatch vs reference"

    print("KERNEL_OK")
</pallas_src>

<mosaic_0001>
module attributes {stable_mosaic.version = 11 : i64} {
  func.func @_add_pe_kernel(%arg0: i32, %arg1: i32, %arg2: memref<2x128xf32, #tpu.memory_space<vmem>>, %arg3: memref<1x128xf32, #tpu.memory_space<vmem>>, %arg4: memref<2x128xf32, #tpu.memory_space<vmem>>) attributes {dimension_semantics = [#tpu.dimension_semantics<parallel>, #tpu.dimension_semantics<parallel>], iteration_bounds = array<i64: 1, 2>, scalar_prefetch = 0 : i64, scratch_operands = 0 : i64, tpu.core_type = #tpu.core_type<tc>, window_params = [{transform_indices = @transform_0, window_bounds = array<i64: 2, 128>}, {transform_indices = @transform_1, window_bounds = array<i64: 1, 128>}, {transform_indices = @transform_2, window_bounds = array<i64: 2, 128>}]} {
    %c0 = arith.constant 0 : index
    %c0_0 = arith.constant 0 : index
    %0 = vector.load %arg2[%c0, %c0_0] : memref<2x128xf32, #tpu.memory_space<vmem>>, vector<2x128xf32>
    %c0_1 = arith.constant 0 : index
    %c0_2 = arith.constant 0 : index
    %1 = vector.load %arg3[%c0_1, %c0_2] : memref<1x128xf32, #tpu.memory_space<vmem>>, vector<1x128xf32>
    %2 = vector.broadcast %1 : vector<1x128xf32> to vector<2x128xf32>
    %3 = arith.addf %0, %2 : vector<2x128xf32>
    %c0_3 = arith.constant 0 : index
    %c0_4 = arith.constant 0 : index
    %4 = vector.load %arg4[%c0_3, %c0_4] : memref<2x128xf32, #tpu.memory_space<vmem>>, vector<2x128xf32>
    tpu.vector_store %arg4[%c0_3, %c0_4], %3 {strides = array<i32>} : memref<2x128xf32, #tpu.memory_space<vmem>>, vector<2x128xf32>,
    return
  }
  func.func @transform_0(%arg0: i32, %arg1: i32) -> (i32, i32) {
    %c0_i32 = arith.constant 0 : i32
    return %arg0, %arg1 : i32, i32
  }
  func.func @transform_1(%arg0: i32, %arg1: i32) -> (i32, i32) {
    %c0_i32 = arith.constant 0 : i32
    %c0_i32_0 = arith.constant 0 : i32
    return %c0_i32, %arg1 : i32, i32
  }
  func.func @transform_2(%arg0: i32, %arg1: i32) -> (i32, i32) {
    %c0_i32 = arith.constant 0 : i32
    return %arg0, %arg1 : i32, i32
  }
}

</mosaic_0001>

<llo_original>
// kernel: positional_encoding_forward.1
$region0: #{positional_encoding_forward.1}
  #allocation0 [shape = 'u32[]', space=smem, size = 0x4, offset = 0x4, fixed_abs, tag = 'smem constant byte address 0x4 - core index']
  #allocation1 [shape = 'u32[144,128]{1,0:T(1,128)}', space=vmem, size = 0x12000, scoped, tag = 'internal scratch']
  %s0 = inlined_call_operand.vmem [shape: f32[2,256], index: 0, kind: input, shape index: {}]
  %s1 = inlined_call_operand.vmem [shape: f32[1,256], index: 1, kind: input, shape index: {}]
  %s2 = inlined_call_operand.vmem [shape: f32[2,256], index: 2, kind: output, shape index: {}]
  %s3 = sld [smem:[#allocation0]]
  $region41: #{positional_encoding_forward.1} parent=0
    _
  %s5 = ssub.s32 1, %s3
  %s6 = scalar_select 0, %s5, %s3
  loop: start=0, step=1, limit=4
  $region2: #{positional_encoding_forward.1} parent=0 // loop_pre_header
    _
  $region3: #{positional_encoding_forward.1} parent=0 // loop_header
    %s8 = sphi 0, %s12
    %p9 = scmp.ge.s32.totalorder %s8, 4
    %s15 = sphi 0, %s27
    %s16 = sphi 0, %s23
    %s17 = sphi 0, %s15
    %s18 = sphi 0, %s16
    %s19 = sphi 0, %s17
    %s20 = sphi 0, %s18
    %s32 = sphi 0, %s34
    %s35 = sphi 0, %s32
    %s36 = sphi 0, %s35
    %s52 = sphi 0, %s36
    %s58 = sphi 0, %s60
    %s61 = sphi 0, %s58
    %s62 = sphi 0, %s61
    %s78 = sphi 0, %s62
    %s86 = sphi 0, %s88
    %s89 = sphi 0, %s86
    %s90 = sphi 0, %s89
    %s106 = sphi 0, %s90
  $region4: #{positional_encoding_forward.1} parent=0 // loop_header_branch
    %11 = sbr.rel (%p9) target = $region8
  $region5: #{positional_encoding_forward.1} parent=0 // loop_body
    %s13 = ssub.s32 %s8, 1
    %s14 = ssub.s32 %s8, 2
    %s21 = sadd.s32 1, %s16
    %p22 = scmp.ge.s32.totalorder %s21, 2
    %s23 = scalar_select %p22, 0, %s21
    %s24 = sadd.s32 1, %s15
    %s25 = scalar_select %p22, %s24, %s15
    %p26 = scmp.ge.s32.totalorder %s25, 1
    %s27 = scalar_select %p26, 0, %s25
    %s28 = ssub.s32 %s15, %s27
    %s29 = ssub.s32 %s16, %s23
    %s30 = sor.u32 %s28, %s29
    %p31 = scmp.eq.s32.totalorder %s30, 0
    %s33 = sadd.s32 %s32, 1
    %s34 = scalar_select %p31, %s32, %s33
    %p37 = pneg %p31
    %p38 = scmp.eq.s32.totalorder %s8, 1
    %p39 = por %p37, %p38
    %p40 = scmp.ne.s32.totalorder %s32, %s35
    %p41 = scmp.eq.s32.totalorder %s8, 0
    %p42 = por %p40, %p41
    %p43 = scmp.ne.s32.totalorder %s32, %s35
    %p44 = scmp.eq.s32.totalorder %s13, 1
    %p45 = por %p43, %p44
    %p46 = scmp.ne.s32.totalorder %s35, %s36
    %p47 = scmp.eq.s32.totalorder %s13, 0
    %p48 = por %p46, %p47
    %p49 = scmp.ne.s32.totalorder %s35, %s36
    %p50 = scmp.eq.s32.totalorder %s14, 1
    %p51 = por %p49, %p50
    %p53 = scmp.ne.s32.totalorder %s36, %s52
    %p54 = scmp.eq.s32.totalorder %s14, 0
    %p55 = por %p53, %p54
    %s56 = ssub.s32 %s16, %s23
    %p57 = scmp.eq.s32.totalorder %s56, 0
    %s59 = sadd.s32 %s58, 1
    %s60 = scalar_select %p57, %s58, %s59
    %p63 = pneg %p57
    %p64 = scmp.eq.s32.totalorder %s8, 1
    %p65 = por %p63, %p64
    %p66 = scmp.ne.s32.totalorder %s58, %s61
    %p67 = scmp.eq.s32.totalorder %s8, 0
    %p68 = por %p66, %p67
    %p69 = scmp.ne.s32.totalorder %s58, %s61
    %p70 = scmp.eq.s32.totalorder %s13, 1
    %p71 = por %p69, %p70
    %p72 = scmp.ne.s32.totalorder %s61, %s62
    %p73 = scmp.eq.s32.totalorder %s13, 0
    %p74 = por %p72, %p73
    %p75 = scmp.ne.s32.totalorder %s61, %s62
    %p76 = scmp.eq.s32.totalorder %s14, 1
    %p77 = por %p75, %p76
    %p79 = scmp.ne.s32.totalorder %s62, %s78
    %p80 = scmp.eq.s32.totalorder %s14, 0
    %p81 = por %p79, %p80
    %s82 = ssub.s32 %s15, %s27
    %s83 = ssub.s32 %s16, %s23
    %s84 = sor.u32 %s82, %s83
    %p85 = scmp.eq.s32.totalorder %s84, 0
    %s87 = sadd.s32 %s86, 1
    %s88 = scalar_select %p85, %s86, %s87
    %p91 = pneg %p85
    %p92 = scmp.eq.s32.totalorder %s8, 1
    %p93 = por %p91, %p92
    %p94 = scmp.ne.s32.totalorder %s86, %s89
    %p95 = scmp.eq.s32.totalorder %s8, 0
    %p96 = por %p94, %p95
    %p97 = scmp.ne.s32.totalorder %s86, %s89
    %p98 = scmp.eq.s32.totalorder %s13, 1
    %p99 = por %p97, %p98
    %p100 = scmp.ne.s32.totalorder %s89, %s90
    %p101 = scmp.eq.s32.totalorder %s13, 0
    %p102 = por %p100, %p101
    %p103 = scmp.ne.s32.totalorder %s89, %s90
    %p104 = scmp.eq.s32.totalorder %s14, 1
    %p105 = por %p103, %p104
    %p107 = scmp.ne.s32.totalorder %s90, %s106
    %p108 = scmp.eq.s32.totalorder %s14, 0
    %p109 = por %p107, %p108
    %p110 = scmp.le.s32.totalorder 1, %s8
    %p111 = scmp.lt.s32.totalorder %s8, 3
    %p112 = pnand %p110, %p111
    %p113 = pneg %p112
    // Predicated region
    $region9: #{positional_encoding_forward.1} parent=5 // pred_check
      _
    $region10: #{positional_encoding_forward.1} parent=5 // pred_check_branch
      %115 = sbr.rel (%p112) target = $region12
    $region11: #{positional_encoding_forward.1} parent=5 // pred_region
      %s116 = ssub.s32 %s8, 1
    $region12: #{positional_encoding_forward.1} parent=5 // pred_fallthru
      _
    %p117 = scmp.lt.s32.totalorder %s8, 2
    // Predicated region
    $region13: #{positional_encoding_forward.1} parent=5 // pred_check
      %p118 = pneg %p117
    $region14: #{positional_encoding_forward.1} parent=5 // pred_check_branch
      %120 = sbr.rel (%p118) target = $region16
    $region15: #{positional_encoding_forward.1} parent=5 // pred_region
      // Predicated region
      $region17: #{positional_encoding_forward.1} parent=15 // pred_check
        %p121 = pneg %p42
      $region18: #{positional_encoding_forward.1} parent=15 // pred_check_branch
        %123 = sbr.rel (%p121) target = $region20
      $region19: #{positional_encoding_forward.1} parent=15 // pred_region
        %p124 = scmp.lt.s32.totalorder %s15, 0
        %s125 = scalar_select %p124, %s15, 0
        %p126 = scmp.lt.s32.totalorder %s16, 1
        %s127 = scalar_select %p126, %s16, 1
        %s128 = smul.addr %s125, 2
        %s129 = sadd.s32 %s127, %s128
        %s130 = smul.addr %s129, 2
        %s131 = scalar_lea.vmem %s0, %s130
      $region20: #{positional_encoding_forward.1} parent=15 // pred_fallthru
        _
      // Predicated region
      $region21: #{positional_encoding_forward.1} parent=15 // pred_check
        %p132 = pneg %p68
      $region22: #{positional_encoding_forward.1} parent=15 // pred_check_branch
        %134 = sbr.rel (%p132) target = $region24
      $region23: #{positional_encoding_forward.1} parent=15 // pred_region
        %p135 = scmp.lt.s32.totalorder %s16, 1
        %s136 = scalar_select %p135, %s16, 1
        %s137 = scalar_lea.vmem %s1, %s136
      $region24: #{positional_encoding_forward.1} parent=15 // pred_fallthru
        _
    $region16: #{positional_encoding_forward.1} parent=5 // pred_fallthru
      _
    %p138 = scmp.le.s32.totalorder 1, %s8
    %p139 = scmp.lt.s32.totalorder %s8, 3
    %p140 = pnand %p138, %p139
    %p141 = pneg %p140
    // Predicated region
    $region25: #{positional_encoding_forward.1} parent=5 // pred_check
      _
    $region26: #{positional_encoding_forward.1} parent=5 // pred_check_branch
      %143 = sbr.rel (%p140) target = $region28
    $region27: #{positional_encoding_forward.1} parent=5 // pred_region
      %s144 = ssub.s32 %s8, 1
      %p145 = scmp.lt.s32.totalorder %s17, 0
      %s146 = scalar_select %p145, %s17, 0
      %p147 = scmp.lt.s32.totalorder %s18, 1
      %s148 = scalar_select %p147, %s18, 1
      %s149 = smul.addr %s146, 2
      %s150 = sadd.s32 %s148, %s149
      %s151 = smul.addr %s150, 2
      %s152 = scalar_lea.vmem %s0, %s151
      %p153 = pneg %p48
      %p154 = pneg %p45
      %p155 = scmp.lt.s32.totalorder %s18, 1
      %s156 = scalar_select %p155, %s18, 1
      %s157 = scalar_lea.vmem %s1, %s156
      %p158 = pneg %p74
      %p159 = pneg %p71
      %p160 = pneg %p102
      %p161 = pneg %p99
      %p162 = scmp.lt.s32.totalorder %s17, 0
      %s163 = scalar_select %p162, %s17, 0
      %p164 = scmp.lt.s32.totalorder %s18, 1
      %s165 = scalar_select %p164, %s18, 1
      %s166 = smul.addr %s163, 2
      %s167 = sadd.s32 %s165, %s166
      %s168 = smul.addr %s167, 2
      %s169 = scalar_lea.vmem %s2, %s168
      %p170 = scmp.lt.s32.totalorder %s17, 0
      %s171 = scalar_select %p170, %s17, 0
      %p172 = scmp.lt.s32.totalorder %s18, 1
      %s173 = scalar_select %p172, %s18, 1
      %s174 = smul.addr %s171, 2
      %s175 = sadd.s32 %s173, %s174
      %s176 = smul.addr %s175, 2
      %s177 = scalar_lea.vmem %s0, %s176
      %p178 = scmp.lt.s32.totalorder %s18, 1
      %s179 = scalar_select %p178, %s18, 1
      %s180 = scalar_lea.vmem %s1, %s179
      %p181 = scmp.lt.s32.totalorder %s17, 0
      %s182 = scalar_select %p181, %s17, 0
      %p183 = scmp.lt.s32.totalorder %s18, 1
      %s184 = scalar_select %p183, %s18, 1
      %s185 = smul.addr %s182, 2
      %s186 = sadd.s32 %s184, %s185
      %s187 = smul.addr %s186, 2
      %s188 = scalar_lea.vmem %s2, %s187
      %v189 = vld [vmem:[%s177] sm:$0x3]
      %v190 = vld [vmem:[%s180] sm:$0x1]
      %v192 = vlaneseq
      %v193 = vshrl.u32 %v192, 7
      %v194 = vsub.s32 0, %v193
      %v195 = vrot.slane %v190, %v194
      %v197 = vadd.f32 %v189, %v195
      %198 = vst [vmem:[%s188] sm:$0x3] %v197
      %p199 = scmp.lt.s32.totalorder %s17, 0
      %s200 = scalar_select %p199, %s17, 0
      %p201 = scmp.lt.s32.totalorder %s18, 1
      %s202 = scalar_select %p201, %s18, 1
      %s203 = smul.addr %s200, 2
      %s204 = sadd.s32 %s202, %s203
      %s205 = smul.addr %s204, 2
      %s206 = scalar_lea.vmem %s2, %s205
      // Predicated region
      $region29: #{positional_encoding_forward.1} parent=27 // pred_check
        %p207 = pneg %p99
      $region30: #{positional_encoding_forward.1} parent=27 // pred_check_branch
        %209 = sbr.rel (%p207) target = $region32
      $region31: #{positional_encoding_forward.1} parent=27 // pred_region
        _
      $region32: #{positional_encoding_forward.1} parent=27 // pred_fallthru
        _
    $region28: #{positional_encoding_forward.1} parent=5 // pred_fallthru
      _
    %p210 = scmp.le.s32.totalorder 2, %s8
    // Predicated region
    $region33: #{positional_encoding_forward.1} parent=5 // pred_check
      %p211 = pneg %p210
    $region34: #{positional_encoding_forward.1} parent=5 // pred_check_branch
      %213 = sbr.rel (%p211) target = $region36
    $region35: #{positional_encoding_forward.1} parent=5 // pred_region
      %s214 = ssub.s32 %s8, 2
      // Predicated region
      $region37: #{positional_encoding_forward.1} parent=35 // pred_check
        %p215 = pneg %p105
      $region38: #{positional_encoding_forward.1} parent=35 // pred_check_branch
        %217 = sbr.rel (%p215) target = $region40
      $region39: #{positional_encoding_forward.1} parent=35 // pred_region
        %p218 = scmp.lt.s32.totalorder %s19, 0
        %s219 = scalar_select %p218, %s19, 0
        %p220 = scmp.lt.s32.totalorder %s20, 1
        %s221 = scalar_select %p220, %s20, 1
        %s222 = smul.addr %s219, 2
        %s223 = sadd.s32 %s221, %s222
        %s224 = smul.addr %s223, 2
        %s225 = scalar_lea.vmem %s2, %s224
      $region40: #{positional_encoding_forward.1} parent=35 // pred_fallthru
        _
    $region36: #{positional_encoding_forward.1} parent=5 // pred_fallthru
      _
  $region6: #{positional_encoding_forward.1} parent=0 // loop_footer
    %s12 = sadd.s32 1, %s8
  $region7: #{positional_encoding_forward.1} parent=0 // loop_footer_branch
    %7 = sbr.rel target = $region3
  $region8: #{positional_encoding_forward.1} parent=0 // loop_exit
    _

</llo_original>
